<compile_context>
chip_gen: v7x
topology: tpu7x:2x2x1
jax: 0.10.0
libtpu: 0.0.40
codegen_flags: <defaults>
</compile_context>

<pallas_src>
import jax
import jax.numpy as jnp
from jax import lax
from jax.experimental import pallas as pl
from jax.experimental.pallas import tpu as pltpu


def _cdiv(a, b):
    return (a + b - 1) // b


def _make_stats_kernel(n_rows, r_tile, chunk_rows, n_chunks, width):
    """Per-channel |x|-sum and (x>0)-count reduction.

    Grid (n_split, tiles_per_core):
      axis 0 ("parallel")  - row-range split across TensorCores (v7x),
      axis 1 ("arbitrary") - sequential streaming of row tiles.
    Input block: (r_tile, width).  Each core writes one (1, width) f32 row of
    the (n_split, width) outputs at its last step.
    """

    def kernel(x_ref, abs_out_ref, pos_out_ref, abs_acc, pos_acc):
        c = pl.program_id(0)
        i = pl.program_id(1)
        n_i = pl.num_programs(1)

        @pl.when(i == 0)
        def _init():
            abs_acc[...] = jnp.zeros_like(abs_acc)
            pos_acc[...] = jnp.zeros_like(pos_acc)

        # First (logical, unclamped) packed-row index covered by this tile.
        tile_row0 = (c * n_i + i) * r_tile

        def accumulate(masked):
            def body(j, carry):
                off = j * chunk_rows
                if not isinstance(off, int):
                    off = pl.multiple_of(off, chunk_rows)
                xf = x_ref[pl.ds(off, chunk_rows), :].astype(jnp.float32)
                if masked:
                    rid = (tile_row0 + off
                           + lax.broadcasted_iota(jnp.int32,
                                                  (chunk_rows, width), 0))
                    xf = jnp.where(rid < n_rows, xf, 0.0)
                abs_acc[...] += jnp.sum(jnp.abs(xf), axis=0, keepdims=True)
                pos_acc[...] += jnp.sum((xf > 0.0).astype(jnp.float32),
                                        axis=0, keepdims=True)
                return carry

            if n_chunks == 1:
                body(0, 0)
            else:
                lax.fori_loop(0, n_chunks, body, 0)

        # Interior tiles take the mask-free fast path; only a tile that crosses
        # (or lies past) the true row count pays for the row mask.
        needs_mask = tile_row0 + r_tile > n_rows

        @pl.when(jnp.logical_not(needs_mask))
        def _bulk():
            accumulate(False)

        @pl.when(needs_mask)
        def _boundary():
            accumulate(True)

        @pl.when(i == n_i - 1)
        def _finalize():
            abs_out_ref[...] = abs_acc[...]
            pos_out_ref[...] = pos_acc[...]

    return kernel


def activation_balancer_forward(
    x,
    *,
    channel_dim=-1,
    min_positive=0.05,
    max_positive=0.95,
    max_factor=0.04,
    sign_gain_factor=0.01,
    scale_gain_factor=0.02,
    min_abs=0.2,
    max_abs=100.0,
    min_prob=0.1,
    count=0,
    max_tile_bytes=8 * 1024 * 1024,
):
    """Returns (y, scale_factor, sign_factor).  y is x (forward is identity)."""
    if channel_dim < 0:
        channel_dim += x.ndim
    num_channels = x.shape[channel_dim]

    # prob as in the module forward (deterministic: active branch, given count).
    prob = max(min_prob, 0.5 ** (1.0 + count / 4000.0))
    sign_gain = sign_gain_factor / prob
    scale_gain = scale_gain_factor / prob

    # Only transpose when channel axis is not already last (costs an extra full
    # HBM read+write of x; see TODO in the header for the in-kernel variant).
    if channel_dim != x.ndim - 1:
        perm = [d for d in range(x.ndim) if d != channel_dim] + [channel_dim]
        xc = jnp.transpose(x, perm)
    else:
        xc = x
    x2 = xc.reshape(-1, num_channels)      # row-major compatible: free
    n_true = x2.shape[0]

    itemsize = jnp.dtype(x.dtype).itemsize
    sub = max(8, 32 // itemsize)           # sublane multiple for this dtype

    # Lane packing: interleave k channel-copies along the 128-lane axis via a
    # free reshape; k is the largest value <= 128//C dividing the row count.
    k_pack = 1
    if num_channels < 128:
        k_pack = max(1, 128 // num_channels)
        while n_true % k_pack:
            k_pack -= 1
    width = k_pack * num_channels
    rows = n_true // k_pack
    xw = x2.reshape(rows, width)           # free reshape: no pad, no copy

    # --- tiling: budget from the PHYSICAL (lane/sublane padded) block size ---
    width_phys = _cdiv(width, 128) * 128
    bytes_per_row = width_phys * itemsize
    rows_pad = _cdiv(rows, sub) * sub

    if rows_pad * bytes_per_row <= max_tile_bytes:
        # Whole array in one grid step; full-dim block => no OOB, no masking.
        r_tile, chunk_rows, n_chunks = rows, rows, 1
        n_split, tiles_per_core, total_tiles = 1, 1, 1
    else:
        budget_rows = max(sub, (max_tile_bytes // bytes_per_row) // sub * sub)
        chunk_rows = min(32 * sub, budget_rows)        # inner-loop slab
        r_tile = max(chunk_rows, budget_rows // chunk_rows * chunk_rows)
        n_chunks = r_tile // chunk_rows
        total_tiles = _cdiv(rows, r_tile)
        n_split = 2 if total_tiles >= 2 else 1         # v7x: one row range / TC
        tiles_per_core = _cdiv(total_tiles, n_split)

    tile_phys_bytes = _cdiv(r_tile, sub) * sub * bytes_per_row
    # Double-buffered input + small outputs/scratch; 32 MiB at the default tile
    # (safe under v7x's 64 MiB physical VMEM, trivial on v5e/v6e).
    vmem_limit = int(max(32 * 1024 * 1024, 2 * tile_phys_bytes + (8 << 20)))

    kernel = _make_stats_kernel(rows, r_tile, chunk_rows, n_chunks, width)

    if n_split * tiles_per_core == total_tiles:
        def x_index_map(c, i):
            return (c * tiles_per_core + i, 0)
    else:
        # Odd tile count with the core split: clamp so no block DMA is issued
        # entirely past the array end; such tiles are fully masked in-kernel.
        def x_index_map(c, i):
            return (jnp.minimum(c * tiles_per_core + i, total_tiles - 1), 0)

    abs2, pos2 = pl.pallas_call(
        kernel,
        out_shape=(
            jax.ShapeDtypeStruct((n_split, width), jnp.float32),
            jax.ShapeDtypeStruct((n_split, width), jnp.float32),
        ),
        grid_spec=pltpu.PrefetchScalarGridSpec(
            num_scalar_prefetch=0,
            grid=(n_split, tiles_per_core),
            in_specs=[pl.BlockSpec((r_tile, width), x_index_map)],
            out_specs=[
                pl.BlockSpec((1, width), lambda c, i: (c, 0)),
                pl.BlockSpec((1, width), lambda c, i: (c, 0)),
            ],
            scratch_shapes=[
                pltpu.VMEM((1, width), jnp.float32),
                pltpu.VMEM((1, width), jnp.float32),
            ],
        ),
        compiler_params=pltpu.CompilerParams(
            dimension_semantics=("parallel", "arbitrary"),
            vmem_limit_bytes=vmem_limit,
        ),
        cost_estimate=pl.CostEstimate(
            flops=5 * n_true * num_channels,
            transcendentals=0,
            bytes_accessed=n_true * num_channels * itemsize
            + 2 * n_split * width * 4,
        ),
    )(xw)

    abs_sum = abs2.sum(axis=0)             # fold the (<=2) per-core rows
    pos_sum = pos2.sum(axis=0)
    if k_pack > 1:
        abs_sum = abs_sum.reshape(k_pack, num_channels).sum(axis=0)
        pos_sum = pos_sum.reshape(k_pack, num_channels).sum(axis=0)

    inv_n = jnp.float32(1.0 / n_true)
    x_abs_mean = abs_sum * inv_n
    prop_pos = pos_sum * inv_n

    # --- scale factor (magnitude constraint) ---
    if min_abs == 0.0:
        below = jnp.zeros_like(x_abs_mean)
    else:
        below = jnp.clip((min_abs - x_abs_mean) * (scale_gain / min_abs),
                         0.0, max_factor)
    above = jnp.clip((x_abs_mean - max_abs) * (scale_gain / max_abs),
                     0.0, max_factor)
    scale_factor = below - above

    # --- sign factor (proportion-positive constraint) ---
    if min_positive == 0.0:
        f1 = jnp.zeros_like(prop_pos)
    else:
        f1 = jnp.clip((min_positive - prop_pos) * (sign_gain / min_positive),
                      0.0, max_factor)
    if max_positive == 1.0:
        f2 = jnp.zeros_like(prop_pos)
    else:
        f2 = jnp.clip((prop_pos - max_positive) * (sign_gain / (1.0 - max_positive)),
                      0.0, max_factor)
    sign_factor = f1 - f2

    # Forward output is identity on x; no kernel output needed for y.
    return x, scale_factor, sign_factor


def _reference_factors(x, channel_dim, min_positive, max_positive, max_factor,
                       sign_gain, scale_gain, min_abs, max_abs):
    if channel_dim < 0:
        channel_dim += x.ndim
    sum_dims = tuple(d for d in range(x.ndim) if d != channel_dim)
    x_abs_mean = jnp.mean(jnp.abs(x.astype(jnp.float32)), axis=sum_dims)
    prop_pos = jnp.mean((x > 0).astype(jnp.float32), axis=sum_dims)
    below = (jnp.clip((min_abs - x_abs_mean) * (scale_gain / min_abs),
                      0.0, max_factor)
             if min_abs != 0.0 else jnp.zeros_like(x_abs_mean))
    above = jnp.clip((x_abs_mean - max_abs) * (scale_gain / max_abs),
                     0.0, max_factor)
    scale = below - above
    f1 = (jnp.clip((min_positive - prop_pos) * (sign_gain / min_positive),
                   0.0, max_factor)
          if min_positive != 0.0 else jnp.zeros_like(prop_pos))
    f2 = (jnp.clip((prop_pos - max_positive) * (sign_gain / (1.0 - max_positive)),
                   0.0, max_factor)
          if max_positive != 1.0 else jnp.zeros_like(prop_pos))
    return scale, f1 - f2


if __name__ == "__main__":
    key = jax.random.PRNGKey(0)
    keys = jax.random.split(key, 6)
    prob = max(0.1, 0.5 ** 1.0)                  # count = 0 -> prob = 0.5
    sgain, cgain = 0.01 / prob, 0.02 / prob

    def check(x, channel_dim, **kw):
        y, scale, sign = activation_balancer_forward(x, channel_dim=channel_dim, **kw)
        jax.block_until_ready((y, scale, sign))
        scale_r, sign_r = _reference_factors(x, channel_dim, 0.05, 0.95, 0.04,
                                             sgain, cgain, 0.2, 100.0)
        assert jnp.array_equal(y, x), "identity output mismatch"
        assert jnp.allclose(scale, scale_r, atol=1e-5, rtol=1e-5), "scale mismatch"
        assert jnp.allclose(sign, sign_r, atol=1e-5, rtol=1e-5), "sign mismatch"

    # 1: small channel count (C=32) -> lane-packed (k=4), single full-dim tile.
    check(jax.random.normal(keys[0], (2, 8, 32), jnp.float32) * 0.1, -1)
    # 2: ragged row count, wide channels (C=512), single full-dim tile (no pad).
    check(jax.random.normal(keys[1], (2, 13, 512), jnp.float32) * 0.5, -1)
    # 3: multi-tile grid + two-core row split (even tile count, tiny budget).
    check(jax.random.normal(keys[2], (4, 96, 256), jnp.float32), -1,
          max_tile_bytes=64 * 1024)
    # 4: odd tile count -> clamped duplicate tile, masked boundary, chunk loop.
    check(jax.random.normal(keys[3], (8, 160, 128), jnp.float32), -1,
          max_tile_bytes=256 * 1024)
    # 5: channel axis not last (channel_dim=1) -> transpose fallback, k=2.
    check(jax.random.normal(keys[4], (2, 64, 10), jnp.float32) * 0.3, 1)
    # 6: non-divisor small C (C=10 -> k=7, width=70, lane-padded block).
    check(jax.random.normal(keys[5], (3, 7, 10), jnp.float32), -1)

    print("KERNEL_OK")
</pallas_src>

<mosaic_0001>
module attributes {stable_mosaic.version = 11 : i64} {
  func.func @kernel(%arg0: i32, %arg1: i32, %arg2: memref<4x128xf32, #tpu.memory_space<vmem>>, %arg3: memref<1x128xf32, #tpu.memory_space<vmem>>, %arg4: memref<1x128xf32, #tpu.memory_space<vmem>>, %arg5: memref<1x128xf32, #tpu.memory_space<vmem>>, %arg6: memref<1x128xf32, #tpu.memory_space<vmem>>) attributes {dimension_semantics = [#tpu.dimension_semantics<parallel>, #tpu.dimension_semantics<arbitrary>], iteration_bounds = array<i64: 1, 1>, scalar_prefetch = 0 : i64, scratch_operands = 2 : i64, tpu.core_type = #tpu.core_type<tc>, window_params = [{transform_indices = @transform_0, window_bounds = array<i64: 4, 128>}, {transform_indices = @transform_1, window_bounds = array<i64: 1, 128>}, {transform_indices = @transform_2, window_bounds = array<i64: 1, 128>}]} {
    %c0_i32 = arith.constant 0 : i32
    %0 = arith.cmpi eq, %arg1, %c0_i32 : i32
    %1 = arith.extui %0 : i1 to i32
    %c0_i32_0 = arith.constant 0 : i32
    %2 = arith.cmpi ne, %1, %c0_i32_0 : i32
    scf.if %2 {
      %cst = arith.constant 0.000000e+00 : f32
      %16 = vector.broadcast %cst : f32 to vector<1x128xf32>
      %c0 = arith.constant 0 : index
      %c0_7 = arith.constant 0 : index
      %17 = vector.load %arg5[%c0, %c0_7] : memref<1x128xf32, #tpu.memory_space<vmem>>, vector<1x128xf32>
      tpu.vector_store %arg5[%c0, %c0_7], %16 {strides = array<i32>} : memref<1x128xf32, #tpu.memory_space<vmem>>, vector<1x128xf32>,
      %cst_8 = arith.constant 0.000000e+00 : f32
      %18 = vector.broadcast %cst_8 : f32 to vector<1x128xf32>
      %c0_9 = arith.constant 0 : index
      %c0_10 = arith.constant 0 : index
      %19 = vector.load %arg6[%c0_9, %c0_10] : memref<1x128xf32, #tpu.memory_space<vmem>>, vector<1x128xf32>
      tpu.vector_store %arg6[%c0_9, %c0_10], %18 {strides = array<i32>} : memref<1x128xf32, #tpu.memory_space<vmem>>, vector<1x128xf32>,
    } else {
    }
    %c1_i32 = arith.constant 1 : i32
    %3 = arith.muli %arg0, %c1_i32 : i32
    %4 = arith.addi %3, %arg1 : i32
    %c4_i32 = arith.constant 4 : i32
    %5 = arith.muli %4, %c4_i32 : i32
    %c4_i32_1 = arith.constant 4 : i32
    %6 = arith.addi %5, %c4_i32_1 : i32
    %c4_i32_2 = arith.constant 4 : i32
    %7 = arith.cmpi sgt, %6, %c4_i32_2 : i32
    %true = arith.constant true
    %8 = arith.xori %7, %true : i1
    %9 = arith.extui %8 : i1 to i32
    %c0_i32_3 = arith.constant 0 : i32
    %10 = arith.cmpi ne, %9, %c0_i32_3 : i32
    scf.if %10 {
      %c0 = arith.constant 0 : index
      %c0_7 = arith.constant 0 : index
      %16 = vector.load %arg2[%c0, %c0_7] : memref<4x128xf32, #tpu.memory_space<vmem>>, vector<4x128xf32>
      %c0_8 = arith.constant 0 : index
      %c0_9 = arith.constant 0 : index
      %17 = vector.load %arg5[%c0_8, %c0_9] : memref<1x128xf32, #tpu.memory_space<vmem>>, vector<1x128xf32>
      %18 = math.absf %16 : vector<4x128xf32>
      %cst = arith.constant dense<0.000000e+00> : vector<128xf32>
      %19 = vector.multi_reduction <add>, %18, %cst [0] : vector<4x128xf32> to vector<128xf32>
      %20 = vector.shape_cast %19 : vector<128xf32> to vector<1x128xf32>
      %21 = arith.addf %17, %20 : vector<1x128xf32>
      %c0_10 = arith.constant 0 : index
      %c0_11 = arith.constant 0 : index
      %22 = vector.load %arg5[%c0_10, %c0_11] : memref<1x128xf32, #tpu.memory_space<vmem>>, vector<1x128xf32>
      tpu.vector_store %arg5[%c0_10, %c0_11], %21 {strides = array<i32>} : memref<1x128xf32, #tpu.memory_space<vmem>>, vector<1x128xf32>,
      %c0_12 = arith.constant 0 : index
      %c0_13 = arith.constant 0 : index
      %23 = vector.load %arg6[%c0_12, %c0_13] : memref<1x128xf32, #tpu.memory_space<vmem>>, vector<1x128xf32>
      %cst_14 = arith.constant 0.000000e+00 : f32
      %24 = vector.broadcast %cst_14 : f32 to vector<4x128xf32>
      %25 = arith.cmpf ogt, %16, %24 : vector<4x128xf32>
      %26 = arith.extui %25 : vector<4x128xi1> to vector<4x128xi32>
      %27 = arith.sitofp %26 : vector<4x128xi32> to vector<4x128xf32>
      %cst_15 = arith.constant dense<0.000000e+00> : vector<128xf32>
      %28 = vector.multi_reduction <add>, %27, %cst_15 [0] : vector<4x128xf32> to vector<128xf32>
      %29 = vector.shape_cast %28 : vector<128xf32> to vector<1x128xf32>
      %30 = arith.addf %23, %29 : vector<1x128xf32>
      %c0_16 = arith.constant 0 : index
      %c0_17 = arith.constant 0 : index
      %31 = vector.load %arg6[%c0_16, %c0_17] : memref<1x128xf32, #tpu.memory_space<vmem>>, vector<1x128xf32>
      tpu.vector_store %arg6[%c0_16, %c0_17], %30 {strides = array<i32>} : memref<1x128xf32, #tpu.memory_space<vmem>>, vector<1x128xf32>,
    } else {
    }
    %11 = arith.extui %7 : i1 to i32
    %c0_i32_4 = arith.constant 0 : i32
    %12 = arith.cmpi ne, %11, %c0_i32_4 : i32
    scf.if %12 {
      %c0 = arith.constant 0 : index
      %c0_7 = arith.constant 0 : index
      %16 = vector.load %arg2[%c0, %c0_7] : memref<4x128xf32, #tpu.memory_space<vmem>>, vector<4x128xf32>
      %c0_i32_8 = arith.constant 0 : i32
      %17 = arith.addi %5, %c0_i32_8 : i32
      %18 = tpu.iota {dimensions = array<i32: 0>} : vector<4x128xi32>
      %19 = vector.broadcast %17 : i32 to vector<4x128xi32>
      %20 = arith.addi %19, %18 : vector<4x128xi32>
      %c4_i32_9 = arith.constant 4 : i32
      %21 = vector.broadcast %c4_i32_9 : i32 to vector<4x128xi32>
      %22 = arith.cmpi slt, %20, %21 : vector<4x128xi32>
      %cst = arith.constant 0.000000e+00 : f32
      %23 = vector.broadcast %cst : f32 to vector<4x128xf32>
      %24 = arith.select %22, %16, %23 : vector<4x128xi1>, vector<4x128xf32>
      %c0_10 = arith.constant 0 : index
      %c0_11 = arith.constant 0 : index
      %25 = vector.load %arg5[%c0_10, %c0_11] : memref<1x128xf32, #tpu.memory_space<vmem>>, vector<1x128xf32>
      %26 = math.absf %24 : vector<4x128xf32>
      %cst_12 = arith.constant dense<0.000000e+00> : vector<128xf32>
      %27 = vector.multi_reduction <add>, %26, %cst_12 [0] : vector<4x128xf32> to vector<128xf32>
      %28 = vector.shape_cast %27 : vector<128xf32> to vector<1x128xf32>
      %29 = arith.addf %25, %28 : vector<1x128xf32>
      %c0_13 = arith.constant 0 : index
      %c0_14 = arith.constant 0 : index
      %30 = vector.load %arg5[%c0_13, %c0_14] : memref<1x128xf32, #tpu.memory_space<vmem>>, vector<1x128xf32>
      tpu.vector_store %arg5[%c0_13, %c0_14], %29 {strides = array<i32>} : memref<1x128xf32, #tpu.memory_space<vmem>>, vector<1x128xf32>,
      %c0_15 = arith.constant 0 : index
      %c0_16 = arith.constant 0 : index
      %31 = vector.load %arg6[%c0_15, %c0_16] : memref<1x128xf32, #tpu.memory_space<vmem>>, vector<1x128xf32>
      %cst_17 = arith.constant 0.000000e+00 : f32
      %32 = vector.broadcast %cst_17 : f32 to vector<4x128xf32>
      %33 = arith.cmpf ogt, %24, %32 : vector<4x128xf32>
      %34 = arith.extui %33 : vector<4x128xi1> to vector<4x128xi32>
      %35 = arith.sitofp %34 : vector<4x128xi32> to vector<4x128xf32>
      %cst_18 = arith.constant dense<0.000000e+00> : vector<128xf32>
      %36 = vector.multi_reduction <add>, %35, %cst_18 [0] : vector<4x128xf32> to vector<128xf32>
      %37 = vector.shape_cast %36 : vector<128xf32> to vector<1x128xf32>
      %38 = arith.addf %31, %37 : vector<1x128xf32>
      %c0_19 = arith.constant 0 : index
      %c0_20 = arith.constant 0 : index
      %39 = vector.load %arg6[%c0_19, %c0_20] : memref<1x128xf32, #tpu.memory_space<vmem>>, vector<1x128xf32>
      tpu.vector_store %arg6[%c0_19, %c0_20], %38 {strides = array<i32>} : memref<1x128xf32, #tpu.memory_space<vmem>>, vector<1x128xf32>,
    } else {
    }
    %c0_i32_5 = arith.constant 0 : i32
    %13 = arith.cmpi eq, %arg1, %c0_i32_5 : i32
    %14 = arith.extui %13 : i1 to i32
    %c0_i32_6 = arith.constant 0 : i32
    %15 = arith.cmpi ne, %14, %c0_i32_6 : i32
    scf.if %15 {
      %c0 = arith.constant 0 : index
      %c0_7 = arith.constant 0 : index
      %16 = vector.load %arg5[%c0, %c0_7] : memref<1x128xf32, #tpu.memory_space<vmem>>, vector<1x128xf32>
      %c0_8 = arith.constant 0 : index
      %c0_9 = arith.constant 0 : index
      %17 = vector.load %arg3[%c0_8, %c0_9] : memref<1x128xf32, #tpu.memory_space<vmem>>, vector<1x128xf32>
      tpu.vector_store %arg3[%c0_8, %c0_9], %16 {strides = array<i32>} : memref<1x128xf32, #tpu.memory_space<vmem>>, vector<1x128xf32>,
      %c0_10 = arith.constant 0 : index
      %c0_11 = arith.constant 0 : index
      %18 = vector.load %arg6[%c0_10, %c0_11] : memref<1x128xf32, #tpu.memory_space<vmem>>, vector<1x128xf32>
      %c0_12 = arith.constant 0 : index
      %c0_13 = arith.constant 0 : index
      %19 = vector.load %arg4[%c0_12, %c0_13] : memref<1x128xf32, #tpu.memory_space<vmem>>, vector<1x128xf32>
      tpu.vector_store %arg4[%c0_12, %c0_13], %18 {strides = array<i32>} : memref<1x128xf32, #tpu.memory_space<vmem>>, vector<1x128xf32>,
    } else {
    }
    return
  }
  func.func @transform_0(%arg0: i32, %arg1: i32) -> (i32, i32) {
    %c1_i32 = arith.constant 1 : i32
    %0 = arith.muli %arg0, %c1_i32 : i32
    %1 = arith.addi %0, %arg1 : i32
    %c0_i32 = arith.constant 0 : i32
    %c0_i32_0 = arith.constant 0 : i32
    return %1, %c0_i32 : i32, i32
  }
  func.func @transform_1(%arg0: i32, %arg1: i32) -> (i32, i32) {
    %c0_i32 = arith.constant 0 : i32
    %c0_i32_0 = arith.constant 0 : i32
    return %arg0, %c0_i32 : i32, i32
  }
  func.func @transform_2(%arg0: i32, %arg1: i32) -> (i32, i32) {
    %c0_i32 = arith.constant 0 : i32
    %c0_i32_0 = arith.constant 0 : i32
    return %arg0, %c0_i32 : i32, i32
  }
}

</mosaic_0001>

<llo_original>
// kernel: tpu_custom_call.1
$region0: #{tpu_custom_call.1}
  #allocation0 [shape = 'u32[]', space=smem, size = 0x4, offset = 0x4, fixed_abs, tag = 'smem constant byte address 0x4 - core index']
  #allocation1 [shape = 'u32[144,128]{1,0:T(1,128)}', space=vmem, size = 0x12000, scoped, tag = 'internal scratch']
  #allocation2 [shape = 'f32[1,128]{1,0:T(1,128)}', space=vmem, size = 0x200, scoped, tag = 'scratch operand']
  #allocation3 [shape = 'f32[1,128]{1,0:T(1,128)}', space=vmem, size = 0x200, scoped, tag = 'scratch operand']
  %s0 = inlined_call_operand.hbm [shape: f32[4,128], index: 0, kind: input, shape index: {}]
  %s1 = inlined_call_operand.hbm [shape: f32[1,128], index: 1, kind: output, shape index: {0}]
  %s2 = inlined_call_operand.hbm [shape: f32[1,128], index: 2, kind: output, shape index: {1}]
  %3 = xla_tuple %s1, %s2
  %s4 = sld [smem:[#allocation0]]
  $region42: #{tpu_custom_call.1} parent=0
    _
  %s6 = ssub.s32 1, %s4
  %s7 = scalar_select 0, %s6, %s4
  $region1: #{tpu_custom_call.1} parent=0
    #allocation4 [shape = 'u8[2048]{0}', space=vmem, size = 0x800, scoped, tag = 'input window, operand 0, single buffered']
    #allocation5 [shape = 's32[1]{0}', space=sflag, size = 0x4, scoped, tag = 'scoped memory for tpu_custom_call.1']
    #allocation6 [shape = 's32[1]{0}', space=sflag, size = 0x4, scoped, tag = 'scoped memory for tpu_custom_call.1']
    #allocation7 [shape = 'u8[512]{0}', space=vmem, size = 0x400, scoped, tag = 'output window, operand 0, single buffered']
    #allocation8 [shape = 'u8[512]{0}', space=vmem, size = 0x400, scoped, tag = 'output window, operand 1, single buffered']
    #allocation9 [shape = 's32[1]{0}', space=sflag, size = 0x4, scoped, tag = 'scoped memory for tpu_custom_call.1']
    %8 = vsyncpa [#allocation5], 0
    %9 = vsyncpa [#allocation6], 0
    %10 = vsyncpa [#allocation9], 0
    // Predicated region
    $region2: #{tpu_custom_call.1} parent=1 // pred_check
      _
    $region3: #{tpu_custom_call.1} parent=1 // pred_check_branch
      %12 = sbr.rel (0) target = $region5
    $region4: #{tpu_custom_call.1} parent=1 // pred_region
      %s13 = sadd.s32 0, 0
      %s15 = ssub.s32 64, 64
      %16 = vsyncadd [#allocation5], %s15
      %s17 = smul.addr %s13, 64
      %s18 = scalar_lea.hbm %s0, %s17
      %s20 = sshll.u32 [#allocation4], 4
      %s21 = int_to_ptr.vmem [resolvable:$true] %s20
      %23 = dma.hbm_to_vmem [thread:$0]  %s18, 64, %s21, [#allocation5]
    $region5: #{tpu_custom_call.1} parent=1 // pred_fallthru
      _
    // Predicated region
    $region6: #{tpu_custom_call.1} parent=1 // pred_check
      _
    $region7: #{tpu_custom_call.1} parent=1 // pred_check_branch
      %25 = sbr.rel (0) target = $region9
    $region8: #{tpu_custom_call.1} parent=1 // pred_region
      %26 = dma.done [#allocation5], 64
    $region9: #{tpu_custom_call.1} parent=1 // pred_fallthru
      _
    %s27 = sadd.s32 0, 0
    %p28 = scmp.eq.s32.totalorder 0, 0
    // Predicated region
    $region10: #{tpu_custom_call.1} parent=1 // pred_check
      %p29 = pneg %p28
    $region11: #{tpu_custom_call.1} parent=1 // pred_check_branch
      %31 = sbr.rel (%p29) target = $region13
    $region12: #{tpu_custom_call.1} parent=1 // pred_region
      %32 = vst [vmem:[#allocation2] sm:$0x1] 0.0
      %33 = vst [vmem:[#allocation3] sm:$0x1] 0.0
    $region13: #{tpu_custom_call.1} parent=1 // pred_fallthru
      _
    %s34 = sadd.s32 0, 0
    %s35 = smul.u32 %s34, 4
    %s36 = sadd.s32 %s35, 4
    %p37 = scmp.gt.s32.totalorder %s36, 4
    %p38 = scmp.le.s32.totalorder %s36, 4
    // Predicated region
    $region14: #{tpu_custom_call.1} parent=1 // pred_check
      %p39 = pneg %p38
    $region15: #{tpu_custom_call.1} parent=1 // pred_check_branch
      %41 = sbr.rel (%p39) target = $region17
    $region16: #{tpu_custom_call.1} parent=1 // pred_region
      %v42 = vld [vmem:[#allocation4] sm:$0xf]
      %v43 = vld [vmem:[#allocation2] sm:$0x1]
      %v44 = vand.u32 2147483647, %v42
      %vm45 = vcmask 1043456
      %v46 = vsel %vm45, %v44, 0.0
      %v47 = vrot.slane %v46, 4
      %v48 = vadd.f32 %v46, %v47
      %v49 = vrot.slane %v48, 2
      %v50 = vadd.f32 %v48, %v49
      %v51 = vrot.slane %v50, 1
      %v52 = vadd.f32 %v50, %v51
      %v53 = vadd.f32 %v43, %v52
      %54 = vst [vmem:[#allocation2] sm:$0x1] %v53
      %v55 = vld [vmem:[#allocation3] sm:$0x1]
      %vm56 = vcmp.gt.f32.partialorder %v42, 0.0
      %v57 = vsel %vm56, 1, 0
      %v58 = vcvt.s32.f32 %v57
      %v59 = vsel %vm45, %v58, 0.0
      %v60 = vrot.slane %v59, 4
      %v61 = vadd.f32 %v59, %v60
      %v62 = vrot.slane %v61, 2
      %v63 = vadd.f32 %v61, %v62
      %v64 = vrot.slane %v63, 1
      %v65 = vadd.f32 %v63, %v64
      %v66 = vadd.f32 %v55, %v65
      %67 = vst [vmem:[#allocation3] sm:$0x1] %v66
    $region17: #{tpu_custom_call.1} parent=1 // pred_fallthru
      _
    // Predicated region
    $region18: #{tpu_custom_call.1} parent=1 // pred_check
      %p68 = pneg %p37
    $region19: #{tpu_custom_call.1} parent=1 // pred_check_branch
      %70 = sbr.rel (%p68) target = $region21
    $region20: #{tpu_custom_call.1} parent=1 // pred_region
      %v71 = vld [vmem:[#allocation4] sm:$0xf]
      %v72 = vlaneseq
      %v73 = vshrl.u32 %v72, 7
      %v74 = vstv %s35
      %v75 = vadd.s32 %v74, %v73
      %vm76 = vcmp.lt.s32.totalorder %v75, 4
      %v77 = vsel %vm76, %v71, 0.0
      %v78 = vld [vmem:[#allocation2] sm:$0x1]
      %v79 = vand.u32 2147483647, %v77
      %vm80 = vcmask 1043456
      %v81 = vsel %vm80, %v79, 0.0
      %v82 = vrot.slane %v81, 4
      %v83 = vadd.f32 %v81, %v82
      %v84 = vrot.slane %v83, 2
      %v85 = vadd.f32 %v83, %v84
      %v86 = vrot.slane %v85, 1
      %v87 = vadd.f32 %v85, %v86
      %v88 = vadd.f32 %v78, %v87
      %89 = vst [vmem:[#allocation2] sm:$0x1] %v88
      %v90 = vld [vmem:[#allocation3] sm:$0x1]
      %vm91 = vcmp.gt.f32.partialorder %v77, 0.0
      %v92 = vsel %vm91, 1, 0
      %v93 = vcvt.s32.f32 %v92
      %v94 = vsel %vm80, %v93, 0.0
      %v95 = vrot.slane %v94, 4
      %v96 = vadd.f32 %v94, %v95
      %v97 = vrot.slane %v96, 2
      %v98 = vadd.f32 %v96, %v97
      %v99 = vrot.slane %v98, 1
      %v100 = vadd.f32 %v98, %v99
      %v101 = vadd.f32 %v90, %v100
      %102 = vst [vmem:[#allocation3] sm:$0x1] %v101
    $region21: #{tpu_custom_call.1} parent=1 // pred_fallthru
      _
    // Predicated region
    $region22: #{tpu_custom_call.1} parent=1 // pred_check
      %p103 = pneg %p28
    $region23: #{tpu_custom_call.1} parent=1 // pred_check_branch
      %105 = sbr.rel (%p103) target = $region25
    $region24: #{tpu_custom_call.1} parent=1 // pred_region
      %v106 = vld [vmem:[#allocation2] sm:$0x1]
      %107 = vst [vmem:[#allocation7] sm:$0x1] %v106
      %v108 = vld [vmem:[#allocation3] sm:$0x1]
      %109 = vst [vmem:[#allocation8] sm:$0x1] %v108
    $region25: #{tpu_custom_call.1} parent=1 // pred_fallthru
      _
    // Predicated region
    $region26: #{tpu_custom_call.1} parent=1 // pred_check
      _
    $region27: #{tpu_custom_call.1} parent=1 // pred_check_branch
      %111 = sbr.rel (0) target = $region29
    $region28: #{tpu_custom_call.1} parent=1 // pred_region
      %s113 = ssub.s32 16, 16
      %114 = vsyncadd [#allocation6], %s113
      %s116 = sshll.u32 [#allocation7], 4
      %s117 = int_to_ptr.vmem [resolvable:$true] %s116
      %119 = dma.vmem_to_hbm [thread:$0]  %s117, 16, %s1, [#allocation6]
    $region29: #{tpu_custom_call.1} parent=1 // pred_fallthru
      _
    // Predicated region
    $region30: #{tpu_custom_call.1} parent=1 // pred_check
      _
    $region31: #{tpu_custom_call.1} parent=1 // pred_check_branch
      %121 = sbr.rel (0) target = $region33
    $region32: #{tpu_custom_call.1} parent=1 // pred_region
      %s123 = ssub.s32 16, 16
      %124 = vsyncadd [#allocation9], %s123
      %s126 = sshll.u32 [#allocation8], 4
      %s127 = int_to_ptr.vmem [resolvable:$true] %s126
      %129 = dma.vmem_to_hbm [thread:$0]  %s127, 16, %s2, [#allocation9]
    $region33: #{tpu_custom_call.1} parent=1 // pred_fallthru
      _
    // Predicated region
    $region34: #{tpu_custom_call.1} parent=1 // pred_check
      _
    $region35: #{tpu_custom_call.1} parent=1 // pred_check_branch
      %131 = sbr.rel (0) target = $region37
    $region36: #{tpu_custom_call.1} parent=1 // pred_region
      %132 = dma.done [#allocation6], 16
    $region37: #{tpu_custom_call.1} parent=1 // pred_fallthru
      _
    // Predicated region
    $region38: #{tpu_custom_call.1} parent=1 // pred_check
      _
    $region39: #{tpu_custom_call.1} parent=1 // pred_check_branch
      %134 = sbr.rel (0) target = $region41
    $region40: #{tpu_custom_call.1} parent=1 // pred_region
      %135 = dma.done [#allocation9], 16
    $region41: #{tpu_custom_call.1} parent=1 // pred_fallthru
      _
    %136 = vsyncpa [#allocation5], 1
    %137 = vsyncpa [#allocation6], 1
    %138 = vsyncpa [#allocation9], 1

</llo_original>
